<compile_context>
chip_gen: v7x
topology: tpu7x:2x2x1
jax: 0.10.0
libtpu: 0.0.40
codegen_flags: <defaults>
</compile_context>

<pallas_src>
import functools

import jax
import jax.numpy as jnp
from jax.experimental import pallas as pl
from jax.experimental.pallas import tpu as pltpu


_ROW_ALIGN = 16    # bf16 packs 16 rows per sublane tile; also fine for f32
_LANE_ALIGN = 128  # vreg lane width


def _round_up(a, b):
    return ((a + b - 1) // b) * b


def _gap_kernel(x_ref, o_ref, acc_ref, *, inv_hw, hw, lane_chunk, lane_ragged):
    # x_ref:   (tile_nc, lane_chunk)  current slab of the flattened input
    # o_ref:   (tile_nc, 1)           per-row mean output (resident across k)
    # acc_ref: (tile_nc, 1)           narrow f32 running-sum scratch
    k = pl.program_id(1)
    nk = pl.num_programs(1)

    x = x_ref[...].astype(jnp.float32)
    if lane_ragged:
        # Only the final lane chunk can run past HW; the compare is cheap
        # (VPU) and correct for every k since earlier chunks are fully valid.
        lane = (
            jax.lax.broadcasted_iota(jnp.int32, x.shape, dimension=1)
            + k * lane_chunk
        )
        x = jnp.where(lane < hw, x, 0.0)

    # One cross-lane reduce per step; XLU has ample slack (HBM-bound kernel).
    partial = jnp.sum(x, axis=-1, keepdims=True)  # (tile_nc, 1) f32

    @pl.when(k == 0)
    def _init():
        acc_ref[...] = partial            # direct write, no zero-init pass

    @pl.when(k > 0)
    def _accumulate():
        acc_ref[...] += partial

    @pl.when(k == nk - 1)
    def _finalize():
        o_ref[...] = (acc_ref[...] * inv_hw).astype(o_ref.dtype)


def _choose_tiles(nc, hw, *, max_rows, max_lanes):
    """Pick (tile_nc, lane_chunk) without requiring any host-side padding."""
    # Lane (reduction) axis: multiple of 128 unless hw itself is tiny.
    if hw <= _LANE_ALIGN:
        lane_chunk = hw                                   # full dim -> legal
    else:
        lane_chunk = min(max_lanes, _round_up(hw, _LANE_ALIGN))

    # Row axis: multiple of 16 (bf16 sublane packing) unless nc is tiny.
    if nc <= _ROW_ALIGN:
        tile_nc = nc                                      # full dim -> legal
    else:
        tile_nc = min(max_rows, _round_up(nc, _ROW_ALIGN))
        if tile_nc > nc:                                  # keep block <= array
            tile_nc = (nc // _ROW_ALIGN) * _ROW_ALIGN
        # v7x megacore: make sure the "parallel" row axis has >= 2 blocks so
        # both TensorCores get work.  Near-zero impact on v5e/v6e (1 TC).
        while pl.cdiv(nc, tile_nc) < 2 and tile_nc >= 2 * _ROW_ALIGN:
            tile_nc = _round_up(tile_nc // 2, _ROW_ALIGN)

    return tile_nc, lane_chunk


def global_avg_pool_pallas(x, *, max_rows=512, max_lanes=2048):
    """Pallas kernel equivalent of `x.mean(dim=(2, 3))` for NCHW input."""
    n, c, h, w = x.shape
    nc, hw = n * c, h * w

    # Flatten: rows = N*C (sublane axis), reduction = H*W (lane axis).
    # Row-major reshape only; no data movement, no padding pre-pass.
    x2 = x.reshape(nc, hw)

    tile_nc, lane_chunk = _choose_tiles(
        nc, hw, max_rows=max_rows, max_lanes=max_lanes
    )
    lane_ragged = (hw % lane_chunk) != 0
    grid = (pl.cdiv(nc, tile_nc), pl.cdiv(hw, lane_chunk))

    # VMEM budget: 2x double-buffered input block + narrow scratch + slack.
    # Clamp to 48 MiB so the same code is safe on v7x (64 MiB per TC).
    itemsize = jnp.dtype(x.dtype).itemsize
    block_bytes = tile_nc * lane_chunk * itemsize
    vmem_limit = int(
        min(max(2 * block_bytes + tile_nc * _LANE_ALIGN * 4 + (2 << 20),
                16 << 20),
            48 << 20)
    )

    kernel = functools.partial(
        _gap_kernel,
        inv_hw=1.0 / float(hw),
        hw=hw,
        lane_chunk=lane_chunk,
        lane_ragged=lane_ragged,
    )

    out = pl.pallas_call(
        kernel,
        out_shape=jax.ShapeDtypeStruct((nc, 1), x.dtype),
        grid_spec=pltpu.PrefetchScalarGridSpec(
            num_scalar_prefetch=0,
            grid=grid,
            in_specs=[
                pl.BlockSpec((tile_nc, lane_chunk), lambda i, k: (i, k)),
            ],
            # Same output block across k -> resident accumulator pattern.
            out_specs=pl.BlockSpec((tile_nc, 1), lambda i, k: (i, 0)),
            scratch_shapes=[pltpu.VMEM((tile_nc, 1), jnp.float32)],
        ),
        compiler_params=pltpu.CompilerParams(
            dimension_semantics=("parallel", "arbitrary"),
            vmem_limit_bytes=vmem_limit,
        ),
    )(x2)

    return out[:, 0].reshape(n, c)


def global_avg_pool(x, *, small_input_bytes=256 * 1024):
    """Spatial mean pool with a fast path for tiny feature maps.

    For inputs below a few hundred KiB the fixed pallas_call launch /
    pipeline-fill cost dominates, so we let XLA fuse a plain reduce instead.
    """
    if x.size * jnp.dtype(x.dtype).itemsize <= small_input_bytes:
        return jnp.mean(x, axis=(2, 3))
    return global_avg_pool_pallas(x)


class Expression:
    """JAX/Pallas analogue of the PyTorch Expression(nn.Module) wrapper."""

    def __init__(self, func):
        self.func = func

    def __call__(self, x):
        return self.func(x)


if __name__ == "__main__":
    key = jax.random.PRNGKey(0)

    # Small shape consistent with a conv feature map: N=2, C=4, H=W=16.
    # Call the Pallas path directly so the kernel itself is exercised
    # (the dispatching `global_avg_pool` would take the tiny-input fast path).
    x = jax.random.normal(key, (2, 4, 16, 16), dtype=jnp.float32)
    expr = Expression(global_avg_pool_pallas)
    y = expr(x)
    jax.block_until_ready(y)

    y_ref = jnp.mean(x, axis=(2, 3))
    assert y.shape == (2, 4)
    assert y.dtype == x.dtype
    assert jnp.allclose(y, y_ref, atol=1e-5, rtol=1e-5)

    # Second check: ragged HW (784 lanes, masked edge) + >=2 row blocks.
    x2 = jax.random.normal(jax.random.PRNGKey(1), (4, 32, 28, 28),
                           dtype=jnp.float32)
    y2 = global_avg_pool_pallas(x2)
    jax.block_until_ready(y2)
    y2_ref = jnp.mean(x2, axis=(2, 3))
    assert y2.shape == (4, 32)
    assert jnp.allclose(y2, y2_ref, atol=1e-5, rtol=1e-5)

    # Dispatching wrapper (matches PyTorch usage) on the tiny input.
    y3 = Expression(global_avg_pool)(x)
    jax.block_until_ready(y3)
    assert jnp.allclose(y3, y_ref, atol=1e-5, rtol=1e-5)

    print("KERNEL_OK")
</pallas_src>

<mosaic_0001>
module attributes {stable_mosaic.version = 11 : i64} {
  func.func @_gap_kernel(%arg0: i32, %arg1: i32, %arg2: memref<8x256xf32, #tpu.memory_space<vmem>>, %arg3: memref<8x1xf32, #tpu.memory_space<vmem>>, %arg4: memref<8x1xf32, #tpu.memory_space<vmem>>) attributes {dimension_semantics = [#tpu.dimension_semantics<parallel>, #tpu.dimension_semantics<arbitrary>], iteration_bounds = array<i64: 1, 1>, scalar_prefetch = 0 : i64, scratch_operands = 1 : i64, tpu.core_type = #tpu.core_type<tc>, window_params = [{transform_indices = @transform_0, window_bounds = array<i64: 8, 256>}, {transform_indices = @transform_1, window_bounds = array<i64: 8, 1>}]} {
    %c0 = arith.constant 0 : index
    %c0_0 = arith.constant 0 : index
    %0 = vector.load %arg2[%c0, %c0_0] : memref<8x256xf32, #tpu.memory_space<vmem>>, vector<8x256xf32>
    %cst = arith.constant dense<0.000000e+00> : vector<8xf32>
    %1 = vector.multi_reduction <add>, %0, %cst [1] : vector<8x256xf32> to vector<8xf32>
    %2 = vector.shape_cast %1 : vector<8xf32> to vector<8x1xf32>
    %c0_i32 = arith.constant 0 : i32
    %3 = arith.cmpi eq, %arg1, %c0_i32 : i32
    %4 = arith.extui %3 : i1 to i32
    %c0_i32_1 = arith.constant 0 : i32
    %5 = arith.cmpi ne, %4, %c0_i32_1 : i32
    scf.if %5 {
      %c0_6 = arith.constant 0 : index
      %c0_7 = arith.constant 0 : index
      %12 = vector.load %arg4[%c0_6, %c0_7] : memref<8x1xf32, #tpu.memory_space<vmem>>, vector<8x1xf32>
      tpu.vector_store %arg4[%c0_6, %c0_7], %2 {strides = array<i32>} : memref<8x1xf32, #tpu.memory_space<vmem>>, vector<8x1xf32>,
    } else {
    }
    %c0_i32_2 = arith.constant 0 : i32
    %6 = arith.cmpi sgt, %arg1, %c0_i32_2 : i32
    %7 = arith.extui %6 : i1 to i32
    %c0_i32_3 = arith.constant 0 : i32
    %8 = arith.cmpi ne, %7, %c0_i32_3 : i32
    scf.if %8 {
      %c0_6 = arith.constant 0 : index
      %c0_7 = arith.constant 0 : index
      %12 = vector.load %arg4[%c0_6, %c0_7] : memref<8x1xf32, #tpu.memory_space<vmem>>, vector<8x1xf32>
      %13 = arith.addf %12, %2 : vector<8x1xf32>
      %c0_8 = arith.constant 0 : index
      %c0_9 = arith.constant 0 : index
      %14 = vector.load %arg4[%c0_8, %c0_9] : memref<8x1xf32, #tpu.memory_space<vmem>>, vector<8x1xf32>
      tpu.vector_store %arg4[%c0_8, %c0_9], %13 {strides = array<i32>} : memref<8x1xf32, #tpu.memory_space<vmem>>, vector<8x1xf32>,
    } else {
    }
    %c0_i32_4 = arith.constant 0 : i32
    %9 = arith.cmpi eq, %arg1, %c0_i32_4 : i32
    %10 = arith.extui %9 : i1 to i32
    %c0_i32_5 = arith.constant 0 : i32
    %11 = arith.cmpi ne, %10, %c0_i32_5 : i32
    scf.if %11 {
      %c0_6 = arith.constant 0 : index
      %c0_7 = arith.constant 0 : index
      %12 = vector.load %arg4[%c0_6, %c0_7] : memref<8x1xf32, #tpu.memory_space<vmem>>, vector<8x1xf32>
      %cst_8 = arith.constant 3.906250e-03 : f32
      %13 = vector.broadcast %cst_8 : f32 to vector<8x1xf32>
      %14 = arith.mulf %12, %13 : vector<8x1xf32>
      %c0_9 = arith.constant 0 : index
      %c0_10 = arith.constant 0 : index
      %15 = vector.load %arg3[%c0_9, %c0_10] : memref<8x1xf32, #tpu.memory_space<vmem>>, vector<8x1xf32>
      tpu.vector_store %arg3[%c0_9, %c0_10], %14 {strides = array<i32>} : memref<8x1xf32, #tpu.memory_space<vmem>>, vector<8x1xf32>,
    } else {
    }
    return
  }
  func.func @transform_0(%arg0: i32, %arg1: i32) -> (i32, i32) {
    %c0_i32 = arith.constant 0 : i32
    return %arg0, %arg1 : i32, i32
  }
  func.func @transform_1(%arg0: i32, %arg1: i32) -> (i32, i32) {
    %c0_i32 = arith.constant 0 : i32
    %c0_i32_0 = arith.constant 0 : i32
    return %arg0, %c0_i32 : i32, i32
  }
}

</mosaic_0001>

<llo_original>
// kernel: tpu_custom_call.1
$region0: #{tpu_custom_call.1}
  #allocation0 [shape = 'u32[]', space=smem, size = 0x4, offset = 0x4, fixed_abs, tag = 'smem constant byte address 0x4 - core index']
  #allocation1 [shape = 'u32[144,128]{1,0:T(1,128)}', space=vmem, size = 0x12000, scoped, tag = 'internal scratch']
  #allocation2 [shape = 'f32[8,1]{1,0:T(8,128)}', space=vmem, size = 0x1000, scoped, tag = 'scratch operand']
  %s0 = inlined_call_operand.hbm [shape: f32[8,256], index: 0, kind: input, shape index: {}]
  %s1 = inlined_call_operand.vmem [shape: f32[8,1], index: 1, kind: output, shape index: {}]
  %s2 = sld [smem:[#allocation0]]
  $region30: #{tpu_custom_call.1} parent=0
    _
  %s4 = ssub.s32 1, %s2
  %s5 = scalar_select 0, %s4, %s2
  $region1: #{tpu_custom_call.1} parent=0
    #allocation3 [shape = 'u8[8192]{0}', space=vmem, size = 0x2000, scoped, tag = 'input window, operand 0, single buffered']
    #allocation4 [shape = 's32[1]{0}', space=sflag, size = 0x4, scoped, tag = 'scoped memory for tpu_custom_call.1']
    %6 = vsyncpa [#allocation4], 0
    // Predicated region
    $region2: #{tpu_custom_call.1} parent=1 // pred_check
      _
    $region3: #{tpu_custom_call.1} parent=1 // pred_check_branch
      %8 = sbr.rel (0) target = $region5
    $region4: #{tpu_custom_call.1} parent=1 // pred_region
      %s10 = ssub.s32 256, 256
      %11 = vsyncadd [#allocation4], %s10
      %s13 = sshll.u32 [#allocation3], 4
      %s14 = int_to_ptr.vmem [resolvable:$true] %s13
      %16 = dma.hbm_to_vmem [thread:$0]  %s0, 256, %s14, [#allocation4]
    $region5: #{tpu_custom_call.1} parent=1 // pred_fallthru
      _
    // Predicated region
    $region6: #{tpu_custom_call.1} parent=1 // pred_check
      _
    $region7: #{tpu_custom_call.1} parent=1 // pred_check_branch
      %18 = sbr.rel (0) target = $region9
    $region8: #{tpu_custom_call.1} parent=1 // pred_region
      %19 = dma.done [#allocation4], 256
    $region9: #{tpu_custom_call.1} parent=1 // pred_fallthru
      _
    %v20 = vld [vmem:[#allocation3] sm:$0xff]
    %v21 = vld [vmem:[#allocation3 + $0x8] sm:$0xff]
    %v22 = vadd.f32 %v20, %v21
    %23 = vadd.xlane.f32.xlu0 %v22
    %v24 = vpop.xlane.xlu0 %23
    %p25 = scmp.eq.s32.totalorder 0, 0
    // Predicated region
    $region10: #{tpu_custom_call.1} parent=1 // pred_check
      %p26 = pneg %p25
    $region11: #{tpu_custom_call.1} parent=1 // pred_check_branch
      %28 = sbr.rel (%p26) target = $region13
    $region12: #{tpu_custom_call.1} parent=1 // pred_region
      %vm29 = vcmask 7168
      %30 = vst.msk [vmem:[#allocation2] sm:$0xff] %vm29, %v24
    $region13: #{tpu_custom_call.1} parent=1 // pred_fallthru
      _
    %p31 = scmp.gt.s32.totalorder 0, 0
    // Predicated region
    $region14: #{tpu_custom_call.1} parent=1 // pred_check
      %p32 = pneg %p31
    $region15: #{tpu_custom_call.1} parent=1 // pred_check_branch
      %34 = sbr.rel (%p32) target = $region17
    $region16: #{tpu_custom_call.1} parent=1 // pred_region
      %v35 = vld [vmem:[#allocation2] sm:$0xff]
      %v36 = vadd.f32 %v35, %v24
      %vm37 = vcmask 7168
      %38 = vst.msk [vmem:[#allocation2] sm:$0xff] %vm37, %v36
    $region17: #{tpu_custom_call.1} parent=1 // pred_fallthru
      _
    // Predicated region
    $region18: #{tpu_custom_call.1} parent=1 // pred_check
      %p39 = pneg %p25
    $region19: #{tpu_custom_call.1} parent=1 // pred_check_branch
      %41 = sbr.rel (%p39) target = $region21
    $region20: #{tpu_custom_call.1} parent=1 // pred_region
      %v42 = vld [vmem:[#allocation2] sm:$0xff]
      %v43 = vmul.f32 %v42, 0.00390625
      %vm44 = vcmask 7168
      %45 = vst.msk [vmem:[%s1] sm:$0xff] %vm44, %v43
    $region21: #{tpu_custom_call.1} parent=1 // pred_fallthru
      _
    // Predicated region
    $region22: #{tpu_custom_call.1} parent=1 // pred_check
      _
    $region23: #{tpu_custom_call.1} parent=1 // pred_check_branch
      %47 = sbr.rel (0) target = $region25
    $region24: #{tpu_custom_call.1} parent=1 // pred_region
      _
    $region25: #{tpu_custom_call.1} parent=1 // pred_fallthru
      _
    // Predicated region
    $region26: #{tpu_custom_call.1} parent=1 // pred_check
      _
    $region27: #{tpu_custom_call.1} parent=1 // pred_check_branch
      %49 = sbr.rel (0) target = $region29
    $region28: #{tpu_custom_call.1} parent=1 // pred_region
      _
    $region29: #{tpu_custom_call.1} parent=1 // pred_fallthru
      _
    %50 = vsyncpa [#allocation4], 1

</llo_original>
